<compile_context>
chip_gen: v7x
topology: tpu7x:2x2x1
jax: 0.10.0
libtpu: 0.0.40
codegen_flags: <defaults>
</compile_context>

<pallas_src>
from functools import partial

import jax
import jax.numpy as jnp
from jax.experimental import pallas as pl
from jax.experimental.pallas import tpu as pltpu

_LANES = 128
_TILE_ROWS = 2048  # 2048 x 128 x 4B = 1 MiB per buffer -> VMEM-safe everywhere


# ----------------------------------------------------------------------------
# Primary path: zero-copy aliased pass-through (no data movement).
# ----------------------------------------------------------------------------
def _touch_kernel(x_ref, o_ref):
    # forward() is the identity.  The output HBM buffer aliases the (donated)
    # input buffer, so the values are already there; touch() only establishes
    # a write dependency on the output -- zero bytes moved.
    del x_ref
    pltpu.touch(o_ref)


@partial(jax.jit, donate_argnums=0)
def _zero_copy_forward(x):
    return pl.pallas_call(
        _touch_kernel,
        out_shape=jax.ShapeDtypeStruct(x.shape, x.dtype),
        in_specs=[pl.BlockSpec(memory_space=pl.ANY)],
        out_specs=pl.BlockSpec(memory_space=pl.ANY),
        input_output_aliases={0: 0},
        cost_estimate=pl.CostEstimate(
            flops=0, transcendentals=0, bytes_accessed=0),
    )(x)


# ----------------------------------------------------------------------------
# Fallback path: lane-dense VMEM copy (only used if zero-copy fails to lower).
# ----------------------------------------------------------------------------
def _copy_kernel(x_ref, o_ref):
    o_ref[...] = x_ref[...]


@jax.jit
def _lane_dense_copy_forward(x):
    orig_shape = x.shape
    total = x.size
    padded = pl.cdiv(total, _LANES) * _LANES
    flat = x.reshape(total)
    if padded != total:
        flat = jnp.pad(flat, (0, padded - total))
    rows = padded // _LANES
    x2d = flat.reshape(rows, _LANES)
    nbytes = x2d.size * x2d.dtype.itemsize

    if rows <= _TILE_ROWS:
        # Tiny slab: single ungridded invocation, whole array in VMEM.
        out2d = pl.pallas_call(
            _copy_kernel,
            out_shape=jax.ShapeDtypeStruct((rows, _LANES), x.dtype),
            in_specs=[pl.BlockSpec(memory_space=pltpu.MemorySpace.VMEM)],
            out_specs=pl.BlockSpec(memory_space=pltpu.MemorySpace.VMEM),
            cost_estimate=pl.CostEstimate(
                flops=0, transcendentals=0, bytes_accessed=2 * nbytes),
        )(x2d)
    else:
        # Large slab: double-buffered row tiles (1 MiB each), grid marked
        # "parallel" so v7x can split the copy across both TensorCores.
        out2d = pl.pallas_call(
            _copy_kernel,
            out_shape=jax.ShapeDtypeStruct((rows, _LANES), x.dtype),
            grid=(pl.cdiv(rows, _TILE_ROWS),),
            in_specs=[pl.BlockSpec((_TILE_ROWS, _LANES), lambda i: (i, 0))],
            out_specs=pl.BlockSpec((_TILE_ROWS, _LANES), lambda i: (i, 0)),
            cost_estimate=pl.CostEstimate(
                flops=0, transcendentals=0, bytes_accessed=2 * nbytes),
            compiler_params=pltpu.CompilerParams(
                dimension_semantics=("parallel",)),
        )(x2d)

    return out2d.reshape(padded)[:total].reshape(orig_shape)


# ----------------------------------------------------------------------------
# One-time probe (per shape/dtype) of the zero-copy path, using a dummy array
# so the module's real parameter is never put at risk during probing.
# ----------------------------------------------------------------------------
_ZERO_COPY_OK = {}


def _zero_copy_ok(shape, dtype):
    key = (tuple(shape), jnp.dtype(dtype).name)
    if key not in _ZERO_COPY_OK:
        try:
            dummy = jnp.zeros(shape, dtype)
            jax.block_until_ready(_zero_copy_forward(dummy))
            _ZERO_COPY_OK[key] = True
        except Exception:
            _ZERO_COPY_OK[key] = False
    return _ZERO_COPY_OK[key]


# ----------------------------------------------------------------------------
# Module mirror.
# ----------------------------------------------------------------------------
class ClassicalOptimizationJAX:
    """Mirror of the PyTorch module: holds parameter x (init = y_zf clone)."""

    def __init__(self, image_dims, y_zf):
        self.image_dims = image_dims
        # nn.Parameter(...) with .data = y_zf.clone()
        self.x = jnp.array(y_zf, dtype=jnp.float32, copy=True)

    def forward(self):
        if _zero_copy_ok(self.x.shape, self.x.dtype):
            out = _zero_copy_forward(self.x)  # donates self.x's buffer
            # The parameter buffer was donated into the aliased output; rebind
            # so the persistent parameter handle remains valid (same physical
            # buffer, no stale/deleted array) across repeated forward() calls.
            self.x = out
            return out
        # Fallback: plain lane-dense copy; no donation, parameter untouched.
        return _lane_dense_copy_forward(self.x)


if __name__ == "__main__":
    # Small shapes consistent with the module: image_dims = (16, 16).
    H, W = 16, 16
    key = jax.random.PRNGKey(0)
    # y_zf: the zero-filled reconstruction the parameter is initialized from.
    y_zf = jax.random.normal(key, (1, H, W, 2), dtype=jnp.float32)

    model = ClassicalOptimizationJAX((H, W), y_zf)

    # First forward pass.
    out1 = model.forward()
    out1 = jax.block_until_ready(out1)
    assert out1.shape == (1, H, W, 2)
    assert out1.dtype == jnp.float32
    ok1 = bool(jnp.array_equal(out1, y_zf))  # check BEFORE second call

    # Second forward pass: exercises the donation + parameter-rebinding path
    # (the persistent parameter must stay valid across repeated calls).
    out2 = model.forward()
    out2 = jax.block_until_ready(out2)
    assert out2.shape == (1, H, W, 2)
    ok2 = bool(jnp.array_equal(out2, y_zf))

    assert ok1 and ok2
    print("KERNEL_OK")
</pallas_src>

<mosaic_0001>
module attributes {stable_mosaic.version = 11 : i64} {
  func.func @_touch_kernel(%arg0: memref<1x16x16x2xf32, #tpu.memory_space<any>>, %arg1: memref<1x16x16x2xf32, #tpu.memory_space<any>>) attributes {dimension_semantics = [], scalar_prefetch = 0 : i64, scratch_operands = 0 : i64, tpu.core_type = #tpu.core_type<tc>} {
    return
  }
}

module attributes {stable_mosaic.version = 11 : i64} {
  func.func @_copy_kernel(%arg0: memref<4x128xf32, #tpu.memory_space<vmem>>, %arg1: memref<4x128xf32, #tpu.memory_space<vmem>>) attributes {dimension_semantics = [], scalar_prefetch = 0 : i64, scratch_operands = 0 : i64, tpu.core_type = #tpu.core_type<tc>} {
    %c0 = arith.constant 0 : index
    %c0_0 = arith.constant 0 : index
    %0 = vector.load %arg0[%c0, %c0_0] : memref<4x128xf32, #tpu.memory_space<vmem>>, vector<4x128xf32>
    %c0_1 = arith.constant 0 : index
    %c0_2 = arith.constant 0 : index
    %1 = vector.load %arg1[%c0_1, %c0_2] : memref<4x128xf32, #tpu.memory_space<vmem>>, vector<4x128xf32>
    tpu.vector_store %arg1[%c0_1, %c0_2], %0 {strides = array<i32>} : memref<4x128xf32, #tpu.memory_space<vmem>>, vector<4x128xf32>,
    return
  }
}

</mosaic_0001>

<llo_original>
// kernel: _zero_copy_forward.1
$region0: #{_zero_copy_forward.1}
  #allocation0 [shape = 'u32[]', space=smem, size = 0x4, offset = 0x4, fixed_abs, tag = 'smem constant byte address 0x4 - core index']
  #allocation1 [shape = 'u32[144,128]{1,0:T(1,128)}', space=vmem, size = 0x12000, scoped, tag = 'internal scratch']
  %s0 = inlined_call_operand.vmem [shape: f32[1,16,16,2], index: 0, kind: input, shape index: {}, may-alias: {0,1}]
  %s1 = inlined_call_operand.vmem [shape: f32[1,16,16,2], index: 1, kind: output, shape index: {}, may-alias: {0,1}]
  %s2 = sld [smem:[#allocation0]]
  $region2: #{_zero_copy_forward.1} parent=0
    _
  %s4 = ssub.s32 1, %s2
  %s5 = scalar_select 0, %s4, %s2

// kernel: _lane_dense_copy_forward.1
$region0: #{_lane_dense_copy_forward.1}
  #allocation0 [shape = 'u32[]', space=smem, size = 0x4, offset = 0x4, fixed_abs, tag = 'smem constant byte address 0x4 - core index']
  #allocation1 [shape = 'u32[144,128]{1,0:T(1,128)}', space=vmem, size = 0x12000, scoped, tag = 'internal scratch']
  %s0 = inlined_call_operand.vmem [shape: f32[4,128], index: 0, kind: input, shape index: {}]
  %s1 = inlined_call_operand.vmem [shape: f32[4,128], index: 1, kind: output, shape index: {}]
  %s2 = sld [smem:[#allocation0]]
  $region14: #{_lane_dense_copy_forward.1} parent=0
    _
  %s4 = ssub.s32 1, %s2
  %s5 = scalar_select 0, %s4, %s2
  // Predicated region
  $region2: #{_lane_dense_copy_forward.1} parent=0 // pred_check
    _
  $region3: #{_lane_dense_copy_forward.1} parent=0 // pred_check_branch
    %7 = sbr.rel (0) target = $region5
  $region4: #{_lane_dense_copy_forward.1} parent=0 // pred_region
    _
  $region5: #{_lane_dense_copy_forward.1} parent=0 // pred_fallthru
    _
  %v8 = vld [vmem:[%s0] sm:$0xf]
  %9 = vst [vmem:[%s1] sm:$0xf] %v8
  // Predicated region
  $region6: #{_lane_dense_copy_forward.1} parent=0 // pred_check
    _
  $region7: #{_lane_dense_copy_forward.1} parent=0 // pred_check_branch
    %11 = sbr.rel (0) target = $region9
  $region8: #{_lane_dense_copy_forward.1} parent=0 // pred_region
    _
  $region9: #{_lane_dense_copy_forward.1} parent=0 // pred_fallthru
    _
  // Predicated region
  $region10: #{_lane_dense_copy_forward.1} parent=0 // pred_check
    _
  $region11: #{_lane_dense_copy_forward.1} parent=0 // pred_check_branch
    %13 = sbr.rel (0) target = $region13
  $region12: #{_lane_dense_copy_forward.1} parent=0 // pred_region
    _
  $region13: #{_lane_dense_copy_forward.1} parent=0 // pred_fallthru
    _

</llo_original>
